<compile_context>
chip_gen: v6e
topology: v6e:2x2x1
jax: 0.10.0
libtpu: 0.0.40
codegen_flags: <defaults>
</compile_context>

<pallas_src>
import functools

import jax
import jax.numpy as jnp
from jax.experimental import pallas as pl
from jax.experimental.pallas import tpu as pltpu


# ---------------------------------------------------------------------------
# Fused kernel: patch-embed (post-pooling) + classifier head
# ---------------------------------------------------------------------------

def fused_eeg_kernel(ps_ref, wp_ref, bp_ref, w1_ref, b1_ref, w2_ref, b2_ref,
                     o_ref, *, inv_n):
    """One grid step = one tile of TILE_B batch rows.

    ps_ref: (TILE_B, K)     f32  token-SUM of raw flattened patches (per batch)
    wp_ref: (K, E_pad)      bf16 patch-embed weight (Conv2d as matmul)
    bp_ref: (1, E_pad)      f32  patch-embed bias (zero-padded lanes)
    w1_ref: (E_pad, H)      bf16 Linear(embed_dim, 256) weight (padded rows)
    b1_ref: (1, H)          f32
    w2_ref: (H, C_pad)      bf16 Linear(256, num_classes) weight (padded cols)
    b2_ref: (1, C_pad)      f32
    o_ref : (TILE_B, C_pad) f32  logits (lane-padded)
    """
    # Token mean of patches (accumulated in f32 outside; only the small pooled
    # vector is cast to bf16 for the MXU).
    pooled = ps_ref[...] * inv_n                                   # (TILE_B, K) f32

    # Patch embedding applied AFTER pooling (exact by linearity); bias hoisted.
    emb = jnp.dot(pooled.astype(jnp.bfloat16), wp_ref[...],
                  preferred_element_type=jnp.float32) + bp_ref[...]   # (TILE_B, E_pad)

    # Classifier head: Linear -> ReLU -> (Dropout eval = identity) -> Linear.
    h = jnp.dot(emb.astype(jnp.bfloat16), w1_ref[...],
                preferred_element_type=jnp.float32) + b1_ref[...]
    h = jnp.maximum(h, 0.0)
    # TODO(synk): nn.Dropout(0.5) is identity in eval mode; no-op here.
    logits = jnp.dot(h.astype(jnp.bfloat16), w2_ref[...],
                     preferred_element_type=jnp.float32) + b2_ref[...]
    o_ref[...] = logits.astype(o_ref.dtype)                        # dense (TILE_B, C_pad)


# ---------------------------------------------------------------------------
# Wrapper
# ---------------------------------------------------------------------------

def _round_up(x, m):
    return ((x + m - 1) // m) * m


def eeg_classifier_forward(x, params, *, patch):
    """EEGClassifier.forward: encoder(x) -> mean over tokens -> MLP head."""
    conv_w, conv_b = params["conv_w"], params["conv_b"]
    w1, b1, w2, b2 = params["w1"], params["b1"], params["w2"], params["b2"]

    B, C, H, W = x.shape
    E = conv_w.shape[0]
    Hd = w1.shape[1]
    NC = w2.shape[1]
    p = patch
    assert H % p == 0 and W % p == 0, "spatial dims must be divisible by patch"
    nh, nw = H // p, W // p
    N = nh * nw
    K = C * p * p

    E_pad = _round_up(E, 128)
    C_pad = _round_up(NC, 128)

    # --- Linearity rewrite: only the per-batch SUM of raw patches is needed.
    # Stride-p spatial sum-pool over NCHW x; result is already in the
    # (c, dh, dw) flatten order that matches Conv2d weight flattening.
    # Single f32 pass over x; no (B, N, K) tensor, no transpose HBM pass.
    patch_sum = x.astype(jnp.float32).reshape(B, C, nh, p, nw, p).sum(axis=(2, 4))
    patch_sum = patch_sum.reshape(B, K)

    # --- Weights: lane-pad embedding / class dims to 128 (padded lanes stay
    # zero end-to-end, so results are exact after slicing); bf16 for the MXU.
    wp = jnp.zeros((K, E_pad), jnp.bfloat16).at[:, :E].set(
        conv_w.reshape(E, K).T.astype(jnp.bfloat16))
    bp = jnp.zeros((1, E_pad), jnp.float32).at[:, :E].set(conv_b)
    w1p = jnp.zeros((E_pad, Hd), jnp.bfloat16).at[:E, :].set(w1.astype(jnp.bfloat16))
    b1p = b1.reshape(1, Hd).astype(jnp.float32)
    w2p = jnp.zeros((Hd, C_pad), jnp.bfloat16).at[:, :NC].set(w2.astype(jnp.bfloat16))
    b2p = jnp.zeros((1, C_pad), jnp.float32).at[:, :NC].set(b2)

    # --- Batch tiling: up to 128 rows per step to fill the MXU M dimension;
    # for small B a single full-dim block is used (always layout-legal).
    if B > 128:
        tile_b = 128
        b_pad = _round_up(B, tile_b)
        if b_pad != B:
            patch_sum = jnp.zeros((b_pad, K), jnp.float32).at[:B].set(patch_sum)
    else:
        tile_b = b_pad = B
    n_tiles = b_pad // tile_b

    kernel = functools.partial(fused_eeg_kernel, inv_n=1.0 / N)

    out = pl.pallas_call(
        kernel,
        out_shape=jax.ShapeDtypeStruct((b_pad, C_pad), jnp.float32),
        grid_spec=pltpu.PrefetchScalarGridSpec(
            num_scalar_prefetch=0,
            grid=(n_tiles,),
            in_specs=[
                pl.BlockSpec((tile_b, K), lambda b: (b, 0)),   # patch sums
                pl.BlockSpec((K, E_pad), lambda b: (0, 0)),    # wp
                pl.BlockSpec((1, E_pad), lambda b: (0, 0)),    # bp
                pl.BlockSpec((E_pad, Hd), lambda b: (0, 0)),   # w1
                pl.BlockSpec((1, Hd), lambda b: (0, 0)),       # b1
                pl.BlockSpec((Hd, C_pad), lambda b: (0, 0)),   # w2
                pl.BlockSpec((1, C_pad), lambda b: (0, 0)),    # b2
            ],
            out_specs=pl.BlockSpec((tile_b, C_pad), lambda b: (b, 0)),
        ),
        # Batch-tile axis is independent -> "parallel" (v7x 2-TC sharding when
        # B > 128 gives >= 2 blocks; no-op on single-TC v5e/v6e).
        compiler_params=pltpu.CompilerParams(
            dimension_semantics=("parallel",)),
    )(patch_sum, wp, bp, w1p, b1p, w2p, b2p)

    return out[:B, :NC]


# ---------------------------------------------------------------------------
# Parameter init + demo
# ---------------------------------------------------------------------------

def init_params(key, in_ch, embed_dim, hidden, num_classes, patch):
    k = jax.random.split(key, 6)
    fan_conv = in_ch * patch * patch
    conv_w = jax.random.normal(k[0], (embed_dim, in_ch, patch, patch),
                               jnp.float32) * (1.0 / jnp.sqrt(fan_conv))
    conv_b = jax.random.normal(k[1], (embed_dim,), jnp.float32) * 0.01
    w1 = jax.random.normal(k[2], (embed_dim, hidden), jnp.float32) * (1.0 / jnp.sqrt(embed_dim))
    b1 = jax.random.normal(k[3], (hidden,), jnp.float32) * 0.01
    w2 = jax.random.normal(k[4], (hidden, num_classes), jnp.float32) * (1.0 / jnp.sqrt(hidden))
    b2 = jax.random.normal(k[5], (num_classes,), jnp.float32) * 0.01
    return {"conv_w": conv_w, "conv_b": conv_b,
            "w1": w1, "b1": b1, "w2": w2, "b2": b2}


if __name__ == "__main__":
    key = jax.random.PRNGKey(0)
    kx, kp = jax.random.split(key)

    # Small shapes: batch=2, channels=4, spatial 16x16, patch 8 -> 4 tokens,
    # embed_dim=32, classifier hidden=256, num_classes=2.
    B, Cin, H, W = 2, 4, 16, 16
    patch, embed_dim, hidden, num_classes = 8, 32, 256, 2

    x = jax.random.normal(kx, (B, Cin, H, W), jnp.float32)
    params = init_params(kp, Cin, embed_dim, hidden, num_classes, patch)

    forward = jax.jit(functools.partial(eeg_classifier_forward, patch=patch))
    logits = forward(x, params)
    logits = jax.block_until_ready(logits)

    # Sanity: compare against a plain-JAX f32 reference computed the "long way"
    # (per-token embedding, then mean) — also validates the linearity rewrite.
    # Kernel uses bf16 MXU operands with f32 accumulation -> loosened tolerance.
    nh, nw = H // patch, W // patch
    ref_patches = x.reshape(B, Cin, nh, patch, nw, patch)
    ref_patches = ref_patches.transpose(0, 2, 4, 1, 3, 5).reshape(B * nh * nw, -1)
    ref_feats = (ref_patches @ params["conv_w"].reshape(embed_dim, -1).T
                 + params["conv_b"]).reshape(B, nh * nw, embed_dim)
    ref_pool = ref_feats.mean(axis=1)
    ref_h = jnp.maximum(ref_pool @ params["w1"] + params["b1"], 0.0)
    ref_logits = ref_h @ params["w2"] + params["b2"]

    assert logits.shape == (B, num_classes)
    assert jnp.allclose(logits, ref_logits, atol=5e-2, rtol=5e-2), "mismatch vs reference"

    print("KERNEL_OK")
</pallas_src>

<mosaic_0001>
module attributes {stable_mosaic.version = 11 : i64} {
  func.func @fused_eeg_kernel(%arg0: i32, %arg1: memref<2x256xf32, #tpu.memory_space<vmem>>, %arg2: memref<256x128xbf16, #tpu.memory_space<vmem>>, %arg3: memref<1x128xf32, #tpu.memory_space<vmem>>, %arg4: memref<128x256xbf16, #tpu.memory_space<vmem>>, %arg5: memref<1x256xf32, #tpu.memory_space<vmem>>, %arg6: memref<256x128xbf16, #tpu.memory_space<vmem>>, %arg7: memref<1x128xf32, #tpu.memory_space<vmem>>, %arg8: memref<2x128xf32, #tpu.memory_space<vmem>>) attributes {dimension_semantics = [#tpu.dimension_semantics<parallel>], iteration_bounds = array<i64: 1>, scalar_prefetch = 0 : i64, scratch_operands = 0 : i64, tpu.core_type = #tpu.core_type<tc>, window_params = [{transform_indices = @transform_0, window_bounds = array<i64: 2, 256>}, {pipeline_mode = #tpu.pipeline_mode<synchronous>, transform_indices = @transform_1, window_bounds = array<i64: 256, 128>}, {pipeline_mode = #tpu.pipeline_mode<synchronous>, transform_indices = @transform_2, window_bounds = array<i64: 1, 128>}, {pipeline_mode = #tpu.pipeline_mode<synchronous>, transform_indices = @transform_3, window_bounds = array<i64: 128, 256>}, {pipeline_mode = #tpu.pipeline_mode<synchronous>, transform_indices = @transform_4, window_bounds = array<i64: 1, 256>}, {pipeline_mode = #tpu.pipeline_mode<synchronous>, transform_indices = @transform_5, window_bounds = array<i64: 256, 128>}, {pipeline_mode = #tpu.pipeline_mode<synchronous>, transform_indices = @transform_6, window_bounds = array<i64: 1, 128>}, {transform_indices = @transform_7, window_bounds = array<i64: 2, 128>}]} {
    %c0 = arith.constant 0 : index
    %c0_0 = arith.constant 0 : index
    %0 = vector.load %arg1[%c0, %c0_0] : memref<2x256xf32, #tpu.memory_space<vmem>>, vector<2x256xf32>
    %cst = arith.constant 2.500000e-01 : f32
    %1 = vector.broadcast %cst : f32 to vector<2x256xf32>
    %2 = arith.mulf %0, %1 : vector<2x256xf32>
    %3 = arith.truncf %2 : vector<2x256xf32> to vector<2x256xbf16>
    %c0_1 = arith.constant 0 : index
    %c0_2 = arith.constant 0 : index
    %4 = vector.load %arg2[%c0_1, %c0_2] : memref<256x128xbf16, #tpu.memory_space<vmem>>, vector<256x128xbf16>
    %cst_3 = arith.constant dense<0.000000e+00> : vector<2x128xf32>
    %5 = tpu.matmul %3, %4, %cst_3 {dimension_numbers = #tpu.dot_dimension_numbers<[1], [0], [0], [1], [0, 0, 1, 1], [], []>} : vector<2x256xbf16>, vector<256x128xbf16>, vector<2x128xf32> -> vector<2x128xf32>
    %c0_4 = arith.constant 0 : index
    %c0_5 = arith.constant 0 : index
    %6 = vector.load %arg3[%c0_4, %c0_5] : memref<1x128xf32, #tpu.memory_space<vmem>>, vector<1x128xf32>
    %7 = vector.broadcast %6 : vector<1x128xf32> to vector<2x128xf32>
    %8 = arith.addf %5, %7 : vector<2x128xf32>
    %9 = arith.truncf %8 : vector<2x128xf32> to vector<2x128xbf16>
    %c0_6 = arith.constant 0 : index
    %c0_7 = arith.constant 0 : index
    %10 = vector.load %arg4[%c0_6, %c0_7] : memref<128x256xbf16, #tpu.memory_space<vmem>>, vector<128x256xbf16>
    %cst_8 = arith.constant dense<0.000000e+00> : vector<2x256xf32>
    %11 = tpu.matmul %9, %10, %cst_8 {dimension_numbers = #tpu.dot_dimension_numbers<[1], [0], [0], [1], [0, 0, 1, 1], [], []>} : vector<2x128xbf16>, vector<128x256xbf16>, vector<2x256xf32> -> vector<2x256xf32>
    %c0_9 = arith.constant 0 : index
    %c0_10 = arith.constant 0 : index
    %12 = vector.load %arg5[%c0_9, %c0_10] : memref<1x256xf32, #tpu.memory_space<vmem>>, vector<1x256xf32>
    %13 = vector.broadcast %12 : vector<1x256xf32> to vector<2x256xf32>
    %14 = arith.addf %11, %13 : vector<2x256xf32>
    %cst_11 = arith.constant 0.000000e+00 : f32
    %15 = vector.broadcast %cst_11 : f32 to vector<2x256xf32>
    %16 = arith.maximumf %14, %15 : vector<2x256xf32>
    %17 = arith.truncf %16 : vector<2x256xf32> to vector<2x256xbf16>
    %c0_12 = arith.constant 0 : index
    %c0_13 = arith.constant 0 : index
    %18 = vector.load %arg6[%c0_12, %c0_13] : memref<256x128xbf16, #tpu.memory_space<vmem>>, vector<256x128xbf16>
    %cst_14 = arith.constant dense<0.000000e+00> : vector<2x128xf32>
    %19 = tpu.matmul %17, %18, %cst_14 {dimension_numbers = #tpu.dot_dimension_numbers<[1], [0], [0], [1], [0, 0, 1, 1], [], []>} : vector<2x256xbf16>, vector<256x128xbf16>, vector<2x128xf32> -> vector<2x128xf32>
    %c0_15 = arith.constant 0 : index
    %c0_16 = arith.constant 0 : index
    %20 = vector.load %arg7[%c0_15, %c0_16] : memref<1x128xf32, #tpu.memory_space<vmem>>, vector<1x128xf32>
    %21 = vector.broadcast %20 : vector<1x128xf32> to vector<2x128xf32>
    %22 = arith.addf %19, %21 : vector<2x128xf32>
    %c0_17 = arith.constant 0 : index
    %c0_18 = arith.constant 0 : index
    %23 = vector.load %arg8[%c0_17, %c0_18] : memref<2x128xf32, #tpu.memory_space<vmem>>, vector<2x128xf32>
    tpu.vector_store %arg8[%c0_17, %c0_18], %22 {strides = array<i32>} : memref<2x128xf32, #tpu.memory_space<vmem>>, vector<2x128xf32>,
    return
  }
  func.func @transform_0(%arg0: i32) -> (i32, i32) {
    %c0_i32 = arith.constant 0 : i32
    %c0_i32_0 = arith.constant 0 : i32
    return %arg0, %c0_i32 : i32, i32
  }
  func.func @transform_1(%arg0: i32) -> (i32, i32) {
    %c0_i32 = arith.constant 0 : i32
    %c0_i32_0 = arith.constant 0 : i32
    %c0_i32_1 = arith.constant 0 : i32
    return %c0_i32, %c0_i32_0 : i32, i32
  }
  func.func @transform_2(%arg0: i32) -> (i32, i32) {
    %c0_i32 = arith.constant 0 : i32
    %c0_i32_0 = arith.constant 0 : i32
    %c0_i32_1 = arith.constant 0 : i32
    return %c0_i32, %c0_i32_0 : i32, i32
  }
  func.func @transform_3(%arg0: i32) -> (i32, i32) {
    %c0_i32 = arith.constant 0 : i32
    %c0_i32_0 = arith.constant 0 : i32
    %c0_i32_1 = arith.constant 0 : i32
    return %c0_i32, %c0_i32_0 : i32, i32
  }
  func.func @transform_4(%arg0: i32) -> (i32, i32) {
    %c0_i32 = arith.constant 0 : i32
    %c0_i32_0 = arith.constant 0 : i32
    %c0_i32_1 = arith.constant 0 : i32
    return %c0_i32, %c0_i32_0 : i32, i32
  }
  func.func @transform_5(%arg0: i32) -> (i32, i32) {
    %c0_i32 = arith.constant 0 : i32
    %c0_i32_0 = arith.constant 0 : i32
    %c0_i32_1 = arith.constant 0 : i32
    return %c0_i32, %c0_i32_0 : i32, i32
  }
  func.func @transform_6(%arg0: i32) -> (i32, i32) {
    %c0_i32 = arith.constant 0 : i32
    %c0_i32_0 = arith.constant 0 : i32
    %c0_i32_1 = arith.constant 0 : i32
    return %c0_i32, %c0_i32_0 : i32, i32
  }
  func.func @transform_7(%arg0: i32) -> (i32, i32) {
    %c0_i32 = arith.constant 0 : i32
    %c0_i32_0 = arith.constant 0 : i32
    return %arg0, %c0_i32 : i32, i32
  }
}

</mosaic_0001>

<llo_original>
// kernel: eeg_classifier_forward.1
$region0: #{eeg_classifier_forward.1}
  #allocation0 [shape = 'u32[]', space=smem, size = 0x4, offset = 0x4, fixed_abs, tag = 'smem constant byte address 0x4 - core index']
  #allocation1 [shape = 'u32[144,128]{1,0:T(1,128)}', space=vmem, size = 0x12000, scoped, tag = 'internal scratch']
  %s0 = inlined_call_operand.vmem [shape: f32[2,256], index: 0, kind: input, shape index: {}]
  %s1 = inlined_call_operand.vmem [shape: bf16[256,128], index: 1, kind: input, shape index: {}]
  %s2 = inlined_call_operand.vmem [shape: f32[1,128], index: 2, kind: input, shape index: {}]
  %s3 = inlined_call_operand.vmem [shape: bf16[128,256], index: 3, kind: input, shape index: {}]
  %s4 = inlined_call_operand.vmem [shape: f32[1,256], index: 4, kind: input, shape index: {}]
  %s5 = inlined_call_operand.vmem [shape: bf16[256,128], index: 5, kind: input, shape index: {}]
  %s6 = inlined_call_operand.vmem [shape: f32[1,128], index: 6, kind: input, shape index: {}]
  %s7 = inlined_call_operand.hbm [shape: f32[2,128], index: 7, kind: output, shape index: {}]
  %s8 = sld [smem:[#allocation0]]
  $region38: #{eeg_classifier_forward.1} parent=0
    _
  %s10 = ssub.s32 1, %s8
  %s11 = scalar_select 0, %s10, %s8
  $region1: #{eeg_classifier_forward.1} parent=0
    #allocation2 [shape = 'u8[1024]{0}', space=vmem, size = 0x400, scoped, tag = 'output window, operand 0, single buffered']
    #allocation3 [shape = 's32[1]{0}', space=sflag, size = 0x4, scoped, tag = 'scoped memory for eeg_classifier_forward.1']
    %12 = vsyncpa [#allocation3], 0
    // Predicated region
    $region2: #{eeg_classifier_forward.1} parent=1 // pred_check
      _
    $region3: #{eeg_classifier_forward.1} parent=1 // pred_check_branch
      %14 = sbr.rel (0) target = $region5
    $region4: #{eeg_classifier_forward.1} parent=1 // pred_region
      _
    $region5: #{eeg_classifier_forward.1} parent=1 // pred_fallthru
      _
    // Predicated region
    $region6: #{eeg_classifier_forward.1} parent=1 // pred_check
      _
    $region7: #{eeg_classifier_forward.1} parent=1 // pred_check_branch
      %16 = sbr.rel (0) target = $region9
    $region8: #{eeg_classifier_forward.1} parent=1 // pred_region
      _
    $region9: #{eeg_classifier_forward.1} parent=1 // pred_fallthru
      _
    // Predicated region
    $region10: #{eeg_classifier_forward.1} parent=1 // pred_check
      _
    $region11: #{eeg_classifier_forward.1} parent=1 // pred_check_branch
      %18 = sbr.rel (0) target = $region13
    $region12: #{eeg_classifier_forward.1} parent=1 // pred_region
      _
    $region13: #{eeg_classifier_forward.1} parent=1 // pred_fallthru
      _
    // Predicated region
    $region14: #{eeg_classifier_forward.1} parent=1 // pred_check
      _
    $region15: #{eeg_classifier_forward.1} parent=1 // pred_check_branch
      %20 = sbr.rel (0) target = $region17
    $region16: #{eeg_classifier_forward.1} parent=1 // pred_region
      _
    $region17: #{eeg_classifier_forward.1} parent=1 // pred_fallthru
      _
    // Predicated region
    $region18: #{eeg_classifier_forward.1} parent=1 // pred_check
      _
    $region19: #{eeg_classifier_forward.1} parent=1 // pred_check_branch
      %22 = sbr.rel (0) target = $region21
    $region20: #{eeg_classifier_forward.1} parent=1 // pred_region
      _
    $region21: #{eeg_classifier_forward.1} parent=1 // pred_fallthru
      _
    // Predicated region
    $region22: #{eeg_classifier_forward.1} parent=1 // pred_check
      _
    $region23: #{eeg_classifier_forward.1} parent=1 // pred_check_branch
      %24 = sbr.rel (0) target = $region25
    $region24: #{eeg_classifier_forward.1} parent=1 // pred_region
      _
    $region25: #{eeg_classifier_forward.1} parent=1 // pred_fallthru
      _
    // Predicated region
    $region26: #{eeg_classifier_forward.1} parent=1 // pred_check
      _
    $region27: #{eeg_classifier_forward.1} parent=1 // pred_check_branch
      %26 = sbr.rel (0) target = $region29
    $region28: #{eeg_classifier_forward.1} parent=1 // pred_region
      _
    $region29: #{eeg_classifier_forward.1} parent=1 // pred_fallthru
      _
    %v28 = vld [vmem:[%s0] sm:$0xf]
    %v29 = vmul.f32 %v28, 0.25
    %v32 = vunpack.c.l.s4 1983009808
    %v33 = vunpack.c.0.s8 %v32
    %v34 = vlaneseq
    %v35 = vshrl.u32 %v34, 7
    %v36 = vsub.s32 %v33, %v35
    %v37 = vrot.slane %v29, %v36
    %v38 = vcombine.high %v37, %v37
    %v41 = vpack.c.bf16 %v37, %v37
    %v42 = vpack.c.bf16 %v38, %v38
    %v43 = vld [vmem:[%s1] sm:$0xf]
    %v44 = vld [vmem:[%s1 + $0x4] sm:$0xf]
    %v45 = vld [vmem:[%s1 + $0x8] sm:$0xf]
    %v46 = vld [vmem:[%s1 + $0xc] sm:$0xf]
    %v47 = vld [vmem:[%s1 + $0x10] sm:$0xf]
    %v48 = vld [vmem:[%s1 + $0x14] sm:$0xf]
    %v49 = vld [vmem:[%s1 + $0x18] sm:$0xf]
    %v50 = vld [vmem:[%s1 + $0x1c] sm:$0xf]
    %v51 = vld [vmem:[%s1 + $0x20] sm:$0xf]
    %v52 = vld [vmem:[%s1 + $0x24] sm:$0xf]
    %v53 = vld [vmem:[%s1 + $0x28] sm:$0xf]
    %v54 = vld [vmem:[%s1 + $0x2c] sm:$0xf]
    %v55 = vld [vmem:[%s1 + $0x30] sm:$0xf]
    %v56 = vld [vmem:[%s1 + $0x34] sm:$0xf]
    %v57 = vld [vmem:[%s1 + $0x38] sm:$0xf]
    %v58 = vld [vmem:[%s1 + $0x3c] sm:$0xf]
    %v59 = vld [vmem:[%s1 + $0x40] sm:$0xf]
    %v60 = vld [vmem:[%s1 + $0x44] sm:$0xf]
    %v61 = vld [vmem:[%s1 + $0x48] sm:$0xf]
    %v62 = vld [vmem:[%s1 + $0x4c] sm:$0xf]
    %v63 = vld [vmem:[%s1 + $0x50] sm:$0xf]
    %v64 = vld [vmem:[%s1 + $0x54] sm:$0xf]
    %v65 = vld [vmem:[%s1 + $0x58] sm:$0xf]
    %v66 = vld [vmem:[%s1 + $0x5c] sm:$0xf]
    %v67 = vld [vmem:[%s1 + $0x60] sm:$0xf]
    %v68 = vld [vmem:[%s1 + $0x64] sm:$0xf]
    %v69 = vld [vmem:[%s1 + $0x68] sm:$0xf]
    %v70 = vld [vmem:[%s1 + $0x6c] sm:$0xf]
    %v71 = vld [vmem:[%s1 + $0x70] sm:$0xf]
    %v72 = vld [vmem:[%s1 + $0x74] sm:$0xf]
    %v73 = vld [vmem:[%s1 + $0x78] sm:$0xf]
    %v74 = vld [vmem:[%s1 + $0x7c] sm:$0xf]
    %v75 = vld [vmem:[%s2] sm:$0x1]
    %v77 = vlaneseq
    %v78 = vshrl.u32 %v77, 7
    %v79 = vsub.s32 0, %v78
    %v80 = vrot.slane %v75, %v79
    %v114 = vunpack.c.l.b16 %v43
    %v115 = vunpack.c.l.b16 %v44
    %v116 = vunpack.c.l.b16 %v45
    %v117 = vunpack.c.l.b16 %v46
    %v118 = vunpack.c.l.b16 %v47
    %v119 = vunpack.c.l.b16 %v48
    %v120 = vunpack.c.l.b16 %v49
    %v121 = vunpack.c.l.b16 %v50
    %v122 = vunpack.c.l.b16 %v51
    %v123 = vunpack.c.l.b16 %v52
    %v124 = vunpack.c.l.b16 %v53
    %v125 = vunpack.c.l.b16 %v54
    %v126 = vunpack.c.l.b16 %v55
    %v127 = vunpack.c.l.b16 %v56
    %v128 = vunpack.c.l.b16 %v57
    %v129 = vunpack.c.l.b16 %v58
    %v130 = vunpack.c.l.b16 %v59
    %v131 = vunpack.c.l.b16 %v60
    %v132 = vunpack.c.l.b16 %v61
    %v133 = vunpack.c.l.b16 %v62
    %v134 = vunpack.c.l.b16 %v63
    %v135 = vunpack.c.l.b16 %v64
    %v136 = vunpack.c.l.b16 %v65
    %v137 = vunpack.c.l.b16 %v66
    %v138 = vunpack.c.l.b16 %v67
    %v139 = vunpack.c.l.b16 %v68
    %v140 = vunpack.c.l.b16 %v69
    %v141 = vunpack.c.l.b16 %v70
    %v142 = vunpack.c.l.b16 %v71
    %v143 = vunpack.c.l.b16 %v72
    %v144 = vunpack.c.l.b16 %v73
    %v145 = vunpack.c.l.b16 %v74
    %v146 = vpack.c.b16 %v115, %v114
    %v147 = vpack.c.b16 %v117, %v116
    %v148 = vpack.c.b16 %v119, %v118
    %v149 = vpack.c.b16 %v121, %v120
    %v150 = vpack.c.b16 %v123, %v122
    %v151 = vpack.c.b16 %v125, %v124
    %v152 = vpack.c.b16 %v127, %v126
    %v153 = vpack.c.b16 %v129, %v128
    %v154 = vpack.c.b16 %v131, %v130
    %v155 = vpack.c.b16 %v133, %v132
    %v156 = vpack.c.b16 %v135, %v134
    %v157 = vpack.c.b16 %v137, %v136
    %v158 = vpack.c.b16 %v139, %v138
    %v159 = vpack.c.b16 %v141, %v140
    %v160 = vpack.c.b16 %v143, %v142
    %v161 = vpack.c.b16 %v145, %v144
    %178 = vmatprep.subr.bf16.mxu0 0
    %179 = vmatpush1.bf16.msra.mxu0 %v153
    %180 = vmatprep.subr.bf16.mxu0 0
    %181 = vmatpush1.bf16.msra.mxu0 %v152
    %182 = vmatprep.subr.bf16.mxu0 0
    %183 = vmatpush1.bf16.msra.mxu0 %v151
    %184 = vmatprep.subr.bf16.mxu0 0
    %185 = vmatpush1.bf16.msra.mxu0 %v150
    %186 = vmatprep.subr.bf16.mxu0 0
    %187 = vmatpush1.bf16.msra.mxu0 %v149
    %188 = vmatprep.subr.bf16.mxu0 0
    %189 = vmatpush1.bf16.msra.mxu0 %v148
    %190 = vmatprep.subr.bf16.mxu0 0
    %191 = vmatpush1.bf16.msra.mxu0 %v147
    %192 = vmatprep.subr.bf16.mxu0 0
    %193 = vmatpush1.bf16.msra.mxu0 %v146
    %194 = vmatprep.subr.bf16.mxu0 0
    %195 = vmatpush2.bf16.msra.mxu0 %v161
    %196 = vmatprep.subr.bf16.mxu0 0
    %197 = vmatpush2.bf16.msra.mxu0 %v160
    %198 = vmatprep.subr.bf16.mxu0 0
    %199 = vmatpush2.bf16.msra.mxu0 %v159
    %200 = vmatprep.subr.bf16.mxu0 0
    %201 = vmatpush2.bf16.msra.mxu0 %v158
    %202 = vmatprep.subr.bf16.mxu0 0
    %203 = vmatpush2.bf16.msra.mxu0 %v157
    %204 = vmatprep.subr.bf16.mxu0 0
    %205 = vmatpush2.bf16.msra.mxu0 %v156
    %206 = vmatprep.subr.bf16.mxu0 0
    %207 = vmatpush2.bf16.msra.mxu0 %v155
    %208 = vmatprep.subr.bf16.mxu0 0
    %209 = vmatpush2.bf16.msra.mxu0 %v154
    %210 = vmatprep.mubr.bf16.mxu0 %v42
    %211 = vmatmul.mubr.bf16.gmra.mxu0 %v41
    %v212 = vpop.f32.mrf.mxu0
    %v213 = vadd.f32 %v80, %v212
    %v214 = vpop.f32.mrf.mxu0
    %v215 = vpop.f32.mrf.mxu0
    %v216 = vpop.f32.mrf.mxu0
    %217 = vdwg.mxu0
    %v218 = vpack.c.bf16 %v213, %v213
    %v219 = vld [vmem:[%s3] sm:$0xff]
    %v220 = vld [vmem:[%s3 + $0x8] sm:$0xff]
    %v221 = vld [vmem:[%s3 + $0x10] sm:$0xff]
    %v222 = vld [vmem:[%s3 + $0x18] sm:$0xff]
    %v223 = vld [vmem:[%s3 + $0x20] sm:$0xff]
    %v224 = vld [vmem:[%s3 + $0x28] sm:$0xff]
    %v225 = vld [vmem:[%s3 + $0x30] sm:$0xff]
    %v226 = vld [vmem:[%s3 + $0x38] sm:$0xff]
    %v227 = vld [vmem:[%s3 + $0x40] sm:$0xff]
    %v228 = vld [vmem:[%s3 + $0x48] sm:$0xff]
    %v229 = vld [vmem:[%s3 + $0x50] sm:$0xff]
    %v230 = vld [vmem:[%s3 + $0x58] sm:$0xff]
    %v231 = vld [vmem:[%s3 + $0x60] sm:$0xff]
    %v232 = vld [vmem:[%s3 + $0x68] sm:$0xff]
    %v233 = vld [vmem:[%s3 + $0x70] sm:$0xff]
    %v234 = vld [vmem:[%s3 + $0x78] sm:$0xff]
    %v235 = vld [vmem:[%s4] sm:$0x3]
    %v237 = vlaneseq
    %v238 = vshrl.u32 %v237, 7
    %v239 = vsub.s32 0, %v238
    %v240 = vrot.slane %v235, %v239
    %v241 = vlaneseq
    %v242 = vshrl.u32 %v241, 7
    %v243 = vsub.s32 1, %v242
    %v244 = vrot.slane %v235, %v243
    %v263 = vunpack.c.l.b16 %v219
    %v264 = vunpack.c.h.b16 %v219
    %v265 = vunpack.c.l.b16 %v220
    %v266 = vunpack.c.h.b16 %v220
    %v267 = vunpack.c.l.b16 %v221
    %v268 = vunpack.c.h.b16 %v221
    %v269 = vunpack.c.l.b16 %v222
    %v270 = vunpack.c.h.b16 %v222
    %v271 = vunpack.c.l.b16 %v223
    %v272 = vunpack.c.h.b16 %v223
    %v273 = vunpack.c.l.b16 %v224
    %v274 = vunpack.c.h.b16 %v224
    %v275 = vunpack.c.l.b16 %v225
    %v276 = vunpack.c.h.b16 %v225
    %v277 = vunpack.c.l.b16 %v226
    %v278 = vunpack.c.h.b16 %v226
    %v279 = vunpack.c.l.b16 %v227
    %v280 = vunpack.c.h.b16 %v227
    %v281 = vunpack.c.l.b16 %v228
    %v282 = vunpack.c.h.b16 %v228
    %v283 = vunpack.c.l.b16 %v229
    %v284 = vunpack.c.h.b16 %v229
    %v285 = vunpack.c.l.b16 %v230
    %v286 = vunpack.c.h.b16 %v230
    %v287 = vunpack.c.l.b16 %v231
    %v288 = vunpack.c.h.b16 %v231
    %v289 = vunpack.c.l.b16 %v232
    %v290 = vunpack.c.h.b16 %v232
    %v291 = vunpack.c.l.b16 %v233
    %v292 = vunpack.c.h.b16 %v233
    %v293 = vunpack.c.l.b16 %v234
    %v294 = vunpack.c.h.b16 %v234
    %v295 = vpack.c.b16 %v265, %v263
    %v296 = vpack.c.b16 %v266, %v264
    %v297 = vpack.c.b16 %v269, %v267
    %v298 = vpack.c.b16 %v270, %v268
    %v299 = vpack.c.b16 %v273, %v271
    %v300 = vpack.c.b16 %v274, %v272
    %v301 = vpack.c.b16 %v277, %v275
    %v302 = vpack.c.b16 %v278, %v276
    %v303 = vpack.c.b16 %v281, %v279
    %v304 = vpack.c.b16 %v282, %v280
    %v305 = vpack.c.b16 %v285, %v283
    %v306 = vpack.c.b16 %v286, %v284
    %v307 = vpack.c.b16 %v289, %v287
    %v308 = vpack.c.b16 %v290, %v288
    %v309 = vpack.c.b16 %v293, %v291
    %v310 = vpack.c.b16 %v294, %v292
    %327 = vmatprep.subr.bf16.mxu0 %v310
    %328 = vmatpush1.bf16.msra.mxu0 %v309
    %329 = vmatprep.subr.bf16.mxu0 %v308
    %330 = vmatpush1.bf16.msra.mxu0 %v307
    %331 = vmatprep.subr.bf16.mxu0 %v306
    %332 = vmatpush1.bf16.msra.mxu0 %v305
    %333 = vmatprep.subr.bf16.mxu0 %v304
    %334 = vmatpush1.bf16.msra.mxu0 %v303
    %335 = vmatprep.subr.bf16.mxu0 %v302
    %336 = vmatpush1.bf16.msra.mxu0 %v301
    %337 = vmatprep.subr.bf16.mxu0 %v300
    %338 = vmatpush1.bf16.msra.mxu0 %v299
    %339 = vmatprep.subr.bf16.mxu0 %v298
    %340 = vmatpush1.bf16.msra.mxu0 %v297
    %341 = vmatprep.subr.bf16.mxu0 %v296
    %342 = vmatpush1.bf16.msra.mxu0 %v295
    %343 = vmatprep.subr.bf16.mxu0 0
    %344 = vmatpush2.bf16.msra.mxu0 0
    %345 = vmatprep.subr.bf16.mxu0 0
    %346 = vmatpush2.bf16.msra.mxu0 0
    %347 = vmatprep.subr.bf16.mxu0 0
    %348 = vmatpush2.bf16.msra.mxu0 0
    %349 = vmatprep.subr.bf16.mxu0 0
    %350 = vmatpush2.bf16.msra.mxu0 0
    %351 = vmatprep.subr.bf16.mxu0 0
    %352 = vmatpush2.bf16.msra.mxu0 0
    %353 = vmatprep.subr.bf16.mxu0 0
    %354 = vmatpush2.bf16.msra.mxu0 0
    %355 = vmatprep.subr.bf16.mxu0 0
    %356 = vmatpush2.bf16.msra.mxu0 0
    %357 = vmatprep.subr.bf16.mxu0 0
    %358 = vmatpush2.bf16.msra.mxu0 0
    %359 = vmatprep.mubr.bf16.mxu0 0
    %360 = vmatmul.mubr.bf16.gmra.mxu0 %v218
    %v361 = vpop.f32.mrf.mxu0
    %v362 = vadd.f32 %v240, %v361
    %v363 = vpop.f32.mrf.mxu0
    %v364 = vadd.f32 %v244, %v363
    %v365 = vpop.f32.mrf.mxu0
    %v366 = vpop.f32.mrf.mxu0
    %367 = vdwg.mxu0
    %v368 = vmax.f32 %v362, 0.0
    %v369 = vmax.f32 %v364, 0.0
    %v370 = vpack.c.bf16 %v368, %v368
    %v371 = vpack.c.bf16 %v369, %v369
    %v372 = vld [vmem:[%s5] sm:$0xf]
    %v373 = vld [vmem:[%s5 + $0x4] sm:$0xf]
    %v374 = vld [vmem:[%s5 + $0x8] sm:$0xf]
    %v375 = vld [vmem:[%s5 + $0xc] sm:$0xf]
    %v376 = vld [vmem:[%s5 + $0x10] sm:$0xf]
    %v377 = vld [vmem:[%s5 + $0x14] sm:$0xf]
    %v378 = vld [vmem:[%s5 + $0x18] sm:$0xf]
    %v379 = vld [vmem:[%s5 + $0x1c] sm:$0xf]
    %v380 = vld [vmem:[%s5 + $0x20] sm:$0xf]
    %v381 = vld [vmem:[%s5 + $0x24] sm:$0xf]
    %v382 = vld [vmem:[%s5 + $0x28] sm:$0xf]
    %v383 = vld [vmem:[%s5 + $0x2c] sm:$0xf]
    %v384 = vld [vmem:[%s5 + $0x30] sm:$0xf]
    %v385 = vld [vmem:[%s5 + $0x34] sm:$0xf]
    %v386 = vld [vmem:[%s5 + $0x38] sm:$0xf]
    %v387 = vld [vmem:[%s5 + $0x3c] sm:$0xf]
    %v388 = vld [vmem:[%s5 + $0x40] sm:$0xf]
    %v389 = vld [vmem:[%s5 + $0x44] sm:$0xf]
    %v390 = vld [vmem:[%s5 + $0x48] sm:$0xf]
    %v391 = vld [vmem:[%s5 + $0x4c] sm:$0xf]
    %v392 = vld [vmem:[%s5 + $0x50] sm:$0xf]
    %v393 = vld [vmem:[%s5 + $0x54] sm:$0xf]
    %v394 = vld [vmem:[%s5 + $0x58] sm:$0xf]
    %v395 = vld [vmem:[%s5 + $0x5c] sm:$0xf]
    %v396 = vld [vmem:[%s5 + $0x60] sm:$0xf]
    %v397 = vld [vmem:[%s5 + $0x64] sm:$0xf]
    %v398 = vld [vmem:[%s5 + $0x68] sm:$0xf]
    %v399 = vld [vmem:[%s5 + $0x6c] sm:$0xf]
    %v400 = vld [vmem:[%s5 + $0x70] sm:$0xf]
    %v401 = vld [vmem:[%s5 + $0x74] sm:$0xf]
    %v402 = vld [vmem:[%s5 + $0x78] sm:$0xf]
    %v403 = vld [vmem:[%s5 + $0x7c] sm:$0xf]
    %v404 = vld [vmem:[%s6] sm:$0x1]
    %v406 = vlaneseq
    %v407 = vshrl.u32 %v406, 7
    %v408 = vsub.s32 0, %v407
    %v409 = vrot.slane %v404, %v408
    %v443 = vunpack.c.l.b16 %v372
    %v444 = vunpack.c.l.b16 %v373
    %v445 = vunpack.c.l.b16 %v374
    %v446 = vunpack.c.l.b16 %v375
    %v447 = vunpack.c.l.b16 %v376
    %v448 = vunpack.c.l.b16 %v377
    %v449 = vunpack.c.l.b16 %v378
    %v450 = vunpack.c.l.b16 %v379
    %v451 = vunpack.c.l.b16 %v380
    %v452 = vunpack.c.l.b16 %v381
    %v453 = vunpack.c.l.b16 %v382
    %v454 = vunpack.c.l.b16 %v383
    %v455 = vunpack.c.l.b16 %v384
    %v456 = vunpack.c.l.b16 %v385
    %v457 = vunpack.c.l.b16 %v386
    %v458 = vunpack.c.l.b16 %v387
    %v459 = vunpack.c.l.b16 %v388
    %v460 = vunpack.c.l.b16 %v389
    %v461 = vunpack.c.l.b16 %v390
    %v462 = vunpack.c.l.b16 %v391
    %v463 = vunpack.c.l.b16 %v392
    %v464 = vunpack.c.l.b16 %v393
    %v465 = vunpack.c.l.b16 %v394
    %v466 = vunpack.c.l.b16 %v395
    %v467 = vunpack.c.l.b16 %v396
    %v468 = vunpack.c.l.b16 %v397
    %v469 = vunpack.c.l.b16 %v398
    %v470 = vunpack.c.l.b16 %v399
    %v471 = vunpack.c.l.b16 %v400
    %v472 = vunpack.c.l.b16 %v401
    %v473 = vunpack.c.l.b16 %v402
    %v474 = vunpack.c.l.b16 %v403
    %v475 = vpack.c.b16 %v444, %v443
    %v476 = vpack.c.b16 %v446, %v445
    %v477 = vpack.c.b16 %v448, %v447
    %v478 = vpack.c.b16 %v450, %v449
    %v479 = vpack.c.b16 %v452, %v451
    %v480 = vpack.c.b16 %v454, %v453
    %v481 = vpack.c.b16 %v456, %v455
    %v482 = vpack.c.b16 %v458, %v457
    %v483 = vpack.c.b16 %v460, %v459
    %v484 = vpack.c.b16 %v462, %v461
    %v485 = vpack.c.b16 %v464, %v463
    %v486 = vpack.c.b16 %v466, %v465
    %v487 = vpack.c.b16 %v468, %v467
    %v488 = vpack.c.b16 %v470, %v469
    %v489 = vpack.c.b16 %v472, %v471
    %v490 = vpack.c.b16 %v474, %v473
    %507 = vmatprep.subr.bf16.mxu0 0
    %508 = vmatpush1.bf16.msra.mxu0 %v482
    %509 = vmatprep.subr.bf16.mxu0 0
    %510 = vmatpush1.bf16.msra.mxu0 %v481
    %511 = vmatprep.subr.bf16.mxu0 0
    %512 = vmatpush1.bf16.msra.mxu0 %v480
    %513 = vmatprep.subr.bf16.mxu0 0
    %514 = vmatpush1.bf16.msra.mxu0 %v479
    %515 = vmatprep.subr.bf16.mxu0 0
    %516 = vmatpush1.bf16.msra.mxu0 %v478
    %517 = vmatprep.subr.bf16.mxu0 0
    %518 = vmatpush1.bf16.msra.mxu0 %v477
    %519 = vmatprep.subr.bf16.mxu0 0
    %520 = vmatpush1.bf16.msra.mxu0 %v476
    %521 = vmatprep.subr.bf16.mxu0 0
    %522 = vmatpush1.bf16.msra.mxu0 %v475
    %523 = vmatprep.subr.bf16.mxu0 0
    %524 = vmatpush2.bf16.msra.mxu0 %v490
    %525 = vmatprep.subr.bf16.mxu0 0
    %526 = vmatpush2.bf16.msra.mxu0 %v489
    %527 = vmatprep.subr.bf16.mxu0 0
    %528 = vmatpush2.bf16.msra.mxu0 %v488
    %529 = vmatprep.subr.bf16.mxu0 0
    %530 = vmatpush2.bf16.msra.mxu0 %v487
    %531 = vmatprep.subr.bf16.mxu0 0
    %532 = vmatpush2.bf16.msra.mxu0 %v486
    %533 = vmatprep.subr.bf16.mxu0 0
    %534 = vmatpush2.bf16.msra.mxu0 %v485
    %535 = vmatprep.subr.bf16.mxu0 0
    %536 = vmatpush2.bf16.msra.mxu0 %v484
    %537 = vmatprep.subr.bf16.mxu0 0
    %538 = vmatpush2.bf16.msra.mxu0 %v483
    %539 = vmatprep.mubr.bf16.mxu0 %v371
    %540 = vmatmul.mubr.bf16.gmra.mxu0 %v370
    %v541 = vpop.f32.mrf.mxu0
    %v542 = vadd.f32 %v409, %v541
    %v543 = vpop.f32.mrf.mxu0
    %v544 = vpop.f32.mrf.mxu0
    %v545 = vpop.f32.mrf.mxu0
    %546 = vdwg.mxu0
    %547 = vst [vmem:[#allocation2] sm:$0x3] %v542
    // Predicated region
    $region30: #{eeg_classifier_forward.1} parent=1 // pred_check
      _
    $region31: #{eeg_classifier_forward.1} parent=1 // pred_check_branch
      %549 = sbr.rel (0) target = $region33
    $region32: #{eeg_classifier_forward.1} parent=1 // pred_region
      %s551 = ssub.s32 32, 32
      %552 = vsyncadd [#allocation3], %s551
      %s554 = sshll.u32 [#allocation2], 4
      %s555 = int_to_ptr.vmem [resolvable:$true] %s554
      %557 = dma.vmem_to_hbm [thread:$0]  %s555, 32, %s7, [#allocation3]
    $region33: #{eeg_classifier_forward.1} parent=1 // pred_fallthru
      _
    // Predicated region
    $region34: #{eeg_classifier_forward.1} parent=1 // pred_check
      _
    $region35: #{eeg_classifier_forward.1} parent=1 // pred_check_branch
      %559 = sbr.rel (0) target = $region37
    $region36: #{eeg_classifier_forward.1} parent=1 // pred_region
      %560 = dma.done [#allocation3], 32
    $region37: #{eeg_classifier_forward.1} parent=1 // pred_fallthru
      _
    %561 = vsyncpa [#allocation3], 1

</llo_original>
